<compile_context>
chip_gen: v7x
topology: tpu7x:2x2x1
jax: 0.10.0
libtpu: 0.0.40
codegen_flags: <defaults>
</compile_context>

<pallas_src>
import jax
import jax.numpy as jnp
from jax.experimental import pallas as pl
from jax.experimental.pallas import tpu as pltpu


def _round_up(n, m):
    return ((n + m - 1) // m) * m


def env_cell_kernel(p_ref, x_ref, o_ref):
    """p_ref: (3, 16, C) packed [W.T ; b] slabs (one per layer, VMEM resident).
    x_ref: (tile_b, 9) batch-major observations.  o_ref: (tile_b, A) logits."""
    num_actions = o_ref.shape[-1]
    h = x_ref[...]
    for layer, (out_dim, relu) in enumerate(((9, True), (9, True),
                                             (num_actions, False))):
        blk = p_ref[layer]                   # (16, C) -- tiny, static index
        w = blk[0:9, 0:out_dim]              # (9, out_dim)  == W.T
        b = blk[9:10, 0:out_dim]             # (1, out_dim)  broadcast over rows
        h = jnp.dot(h, w, preferred_element_type=jnp.float32) + b
        if relu:
            h = jnp.maximum(h, 0.0)
    o_ref[...] = h.astype(o_ref.dtype)


def pack_params(params):
    """Pack the 6 PyTorch-layout tensors (W: (out,in), b: (out,)) into a single
    (..., 3, 16, C) f32 slab; leading population dims are preserved.
    Layout per layer: rows 0..8 = W.T, row 9 = bias, zeros elsewhere."""
    w1, b1 = params["w1"], params["b1"]
    w2, b2 = params["w2"], params["b2"]
    w3, b3 = params["w3"], params["b3"]
    num_actions = w3.shape[-2]
    C = max(9, num_actions)
    lead = w1.shape[:-2]

    def slab(w, b):
        out_dim = w.shape[-2]
        wt = jnp.swapaxes(w, -1, -2)                                 # (...,9,out)
        s = jnp.concatenate([wt, b[..., None, :]], axis=-2)          # (...,10,out)
        pad = [(0, 0)] * len(lead) + [(0, 16 - 10), (0, C - out_dim)]
        return jnp.pad(s, pad)

    pack = jnp.stack([slab(w1, b1), slab(w2, b2), slab(w3, b3)], axis=len(lead))
    return pack.astype(jnp.float32), num_actions


def _pick_tile(batch, tile_b, num_cells):
    """Largest batch tile that is a multiple of 8 (or the full batch) while
    keeping >=2 grid steps for megacore when a single cell has lots of rows."""
    tile_b = max(8, (int(tile_b) // 8) * 8)
    if num_cells == 1 and batch > 2048:
        tile_b = min(tile_b, _round_up(pl.cdiv(batch, 2), 8))
    if batch <= tile_b:
        return batch            # single full-extent block (no (8,128) constraint)
    return tile_b


def env_cell_forward(x, params, *, tile_b=8192, vmem_limit_bytes=48 * 1024 * 1024):
    """Forward pass of EnvCell.

    x: (batch, 9) for one cell, or (P, batch, 9) for a population of P cells.
    params: dict of PyTorch-layout tensors w1,b1,w2,b2,w3,b3; for the population
    case every tensor carries a leading P axis (stacked cells).
    Returns (batch, num_actions) or (P, batch, num_actions), float32."""
    pack, num_actions = pack_params(params)

    single = x.ndim == 2
    if single:
        x = x[None]          # free reshape, no data movement
        pack = pack[None]
    P, B, F = x.shape
    assert F == 9, "EnvCell expects 9 input features"
    assert pack.shape[0] == P, "params must be stacked to match the population"
    C = pack.shape[-1]

    tb = _pick_tile(B, tile_b, P)
    nb = pl.cdiv(B, tb)

    flops = 2 * P * B * (81 + 81 + 9 * num_actions)
    bytes_accessed = P * (B * (9 + num_actions) + 3 * 16 * C) * 4

    out = pl.pallas_call(
        env_cell_kernel,
        out_shape=jax.ShapeDtypeStruct((P, B, num_actions), jnp.float32),
        grid=(P, nb),
        in_specs=[
            # One packed parameter slab per cell, constant across batch tiles
            # (DMA'd once per cell, stays VMEM resident).
            pl.BlockSpec((None, 3, 16, C), lambda p, i: (p, 0, 0, 0)),
            # Batch-major observation tiles; last dim 9 == full array dim.
            pl.BlockSpec((None, tb, 9), lambda p, i: (p, i, 0)),
        ],
        out_specs=pl.BlockSpec((None, tb, num_actions), lambda p, i: (p, i, 0)),
        compiler_params=pltpu.CompilerParams(
            dimension_semantics=("parallel", "parallel"),
            vmem_limit_bytes=vmem_limit_bytes,
        ),
        cost_estimate=pl.CostEstimate(
            flops=flops, transcendentals=0, bytes_accessed=bytes_accessed),
    )(pack, x)

    return out[0] if single else out


def init_params(key, num_actions, population=None):
    """nn.Linear-shaped params (PyTorch (out, in) weights, (out,) biases),
    optionally stacked along a leading population axis."""
    lead = () if population is None else (population,)
    k1, k2, k3, k4, k5, k6 = jax.random.split(key, 6)
    bound = 1.0 / jnp.sqrt(9.0)  # PyTorch default uniform bound for in_features=9
    u = lambda k, shape: jax.random.uniform(k, lead + shape, jnp.float32, -bound, bound)
    return {"w1": u(k1, (9, 9)), "b1": u(k2, (9,)),
            "w2": u(k3, (9, 9)), "b2": u(k4, (9,)),
            "w3": u(k5, (num_actions, 9)), "b3": u(k6, (num_actions,))}


def env_cell_ref(x, params):
    """Pure-JAX reference identical to the PyTorch forward (x @ W.T + b)."""
    h1 = jnp.maximum(x @ params["w1"].T + params["b1"], 0.0)
    h2 = jnp.maximum(h1 @ params["w2"].T + params["b2"], 0.0)
    return h2 @ params["w3"].T + params["b3"]


if __name__ == "__main__":
    key = jax.random.PRNGKey(0)
    kp, kx1, kx2, kpp, kpx = jax.random.split(key, 5)

    # 1) Single EnvCell, small batch (the module's actual usage pattern).
    num_actions = 4
    params = init_params(kp, num_actions)
    x = jax.random.normal(kx1, (8, 9), jnp.float32)
    out = jax.block_until_ready(env_cell_forward(x, params))
    ref = env_cell_ref(x, params)
    assert out.shape == (8, num_actions)
    assert jnp.allclose(out, ref, atol=1e-5, rtol=1e-5)

    # 2) Ragged multi-step batch grid (cdiv grid, masked final block, no pad copy).
    x2 = jax.random.normal(kx2, (300, 9), jnp.float32)
    out2 = jax.block_until_ready(env_cell_forward(x2, params, tile_b=128))
    ref2 = env_cell_ref(x2, params)
    assert out2.shape == (300, num_actions)
    assert jnp.allclose(out2, ref2, atol=1e-5, rtol=1e-5)

    # 3) Coevolution population: P independent cells evaluated in ONE pallas_call.
    P, B, A = 3, 16, 12
    pop_params = init_params(kpp, A, population=P)
    xp = jax.random.normal(kpx, (P, B, 9), jnp.float32)
    outp = jax.block_until_ready(env_cell_forward(xp, pop_params))
    refp = jax.vmap(env_cell_ref)(xp, pop_params)
    assert outp.shape == (P, B, A)
    assert jnp.allclose(outp, refp, atol=1e-5, rtol=1e-5)

    print("KERNEL_OK")
</pallas_src>

<mosaic_0001>
module attributes {stable_mosaic.version = 11 : i64} {
  func.func @env_cell_kernel(%arg0: i32, %arg1: i32, %arg2: memref<1x3x16x9xf32, #tpu.memory_space<vmem>>, %arg3: memref<1x8x9xf32, #tpu.memory_space<vmem>>, %arg4: memref<1x8x4xf32, #tpu.memory_space<vmem>>) attributes {dimension_semantics = [#tpu.dimension_semantics<parallel>, #tpu.dimension_semantics<parallel>], iteration_bounds = array<i64: 1, 1>, scalar_prefetch = 0 : i64, scratch_operands = 0 : i64, tpu.core_type = #tpu.core_type<tc>, window_params = [{transform_indices = @transform_0, window_bounds = array<i64: 1, 3, 16, 9>}, {transform_indices = @transform_1, window_bounds = array<i64: 1, 8, 9>}, {transform_indices = @transform_2, window_bounds = array<i64: 1, 8, 4>}]} {
    %c0 = arith.constant 0 : index
    %c0_0 = arith.constant 0 : index
    %c0_1 = arith.constant 0 : index
    %0 = vector.load %arg3[%c0, %c0_0, %c0_1] : memref<1x8x9xf32, #tpu.memory_space<vmem>>, vector<1x8x9xf32>
    %1 = vector.shape_cast %0 : vector<1x8x9xf32> to vector<8x9xf32>
    %c0_2 = arith.constant 0 : index
    %c0_3 = arith.constant 0 : index
    %c0_4 = arith.constant 0 : index
    %c0_5 = arith.constant 0 : index
    %2 = vector.load %arg2[%c0_2, %c0_3, %c0_4, %c0_5] : memref<1x3x16x9xf32, #tpu.memory_space<vmem>>, vector<1x1x16x9xf32>
    %3 = vector.shape_cast %2 : vector<1x1x16x9xf32> to vector<16x9xf32>
    %4 = vector.extract_strided_slice %3 {offsets = [0, 0], sizes = [9, 9], strides = [1, 1]} : vector<16x9xf32> to vector<9x9xf32>
    %5 = vector.extract_strided_slice %3 {offsets = [9, 0], sizes = [1, 9], strides = [1, 1]} : vector<16x9xf32> to vector<1x9xf32>
    %cst = arith.constant dense<0.000000e+00> : vector<8x9xf32>
    %6 = tpu.matmul %1, %4, %cst {dimension_numbers = #tpu.dot_dimension_numbers<[1], [0], [0], [1], [0, 0, 1, 1], [], []>} : vector<8x9xf32>, vector<9x9xf32>, vector<8x9xf32> -> vector<8x9xf32>
    %7 = vector.broadcast %5 : vector<1x9xf32> to vector<8x9xf32>
    %8 = arith.addf %6, %7 : vector<8x9xf32>
    %cst_6 = arith.constant 0.000000e+00 : f32
    %9 = vector.broadcast %cst_6 : f32 to vector<8x9xf32>
    %10 = arith.maximumf %8, %9 : vector<8x9xf32>
    %c0_7 = arith.constant 0 : index
    %c1 = arith.constant 1 : index
    %c0_8 = arith.constant 0 : index
    %c0_9 = arith.constant 0 : index
    %11 = vector.load %arg2[%c0_7, %c1, %c0_8, %c0_9] : memref<1x3x16x9xf32, #tpu.memory_space<vmem>>, vector<1x1x16x9xf32>
    %12 = vector.shape_cast %11 : vector<1x1x16x9xf32> to vector<16x9xf32>
    %13 = vector.extract_strided_slice %12 {offsets = [0, 0], sizes = [9, 9], strides = [1, 1]} : vector<16x9xf32> to vector<9x9xf32>
    %14 = vector.extract_strided_slice %12 {offsets = [9, 0], sizes = [1, 9], strides = [1, 1]} : vector<16x9xf32> to vector<1x9xf32>
    %cst_10 = arith.constant dense<0.000000e+00> : vector<8x9xf32>
    %15 = tpu.matmul %10, %13, %cst_10 {dimension_numbers = #tpu.dot_dimension_numbers<[1], [0], [0], [1], [0, 0, 1, 1], [], []>} : vector<8x9xf32>, vector<9x9xf32>, vector<8x9xf32> -> vector<8x9xf32>
    %16 = vector.broadcast %14 : vector<1x9xf32> to vector<8x9xf32>
    %17 = arith.addf %15, %16 : vector<8x9xf32>
    %cst_11 = arith.constant 0.000000e+00 : f32
    %18 = vector.broadcast %cst_11 : f32 to vector<8x9xf32>
    %19 = arith.maximumf %17, %18 : vector<8x9xf32>
    %c0_12 = arith.constant 0 : index
    %c2 = arith.constant 2 : index
    %c0_13 = arith.constant 0 : index
    %c0_14 = arith.constant 0 : index
    %20 = vector.load %arg2[%c0_12, %c2, %c0_13, %c0_14] : memref<1x3x16x9xf32, #tpu.memory_space<vmem>>, vector<1x1x16x9xf32>
    %21 = vector.shape_cast %20 : vector<1x1x16x9xf32> to vector<16x9xf32>
    %22 = vector.extract_strided_slice %21 {offsets = [0, 0], sizes = [9, 4], strides = [1, 1]} : vector<16x9xf32> to vector<9x4xf32>
    %23 = vector.extract_strided_slice %21 {offsets = [9, 0], sizes = [1, 4], strides = [1, 1]} : vector<16x9xf32> to vector<1x4xf32>
    %cst_15 = arith.constant dense<0.000000e+00> : vector<8x4xf32>
    %24 = tpu.matmul %19, %22, %cst_15 {dimension_numbers = #tpu.dot_dimension_numbers<[1], [0], [0], [1], [0, 0, 1, 1], [], []>} : vector<8x9xf32>, vector<9x4xf32>, vector<8x4xf32> -> vector<8x4xf32>
    %25 = vector.broadcast %23 : vector<1x4xf32> to vector<8x4xf32>
    %26 = arith.addf %24, %25 : vector<8x4xf32>
    %c0_16 = arith.constant 0 : index
    %c0_17 = arith.constant 0 : index
    %c0_18 = arith.constant 0 : index
    %27 = vector.load %arg4[%c0_16, %c0_17, %c0_18] : memref<1x8x4xf32, #tpu.memory_space<vmem>>, vector<1x8x4xf32>
    %28 = vector.shape_cast %27 : vector<1x8x4xf32> to vector<8x4xf32>
    %29 = vector.shape_cast %26 : vector<8x4xf32> to vector<1x8x4xf32>
    tpu.vector_store %arg4[%c0_16, %c0_17, %c0_18], %29 {strides = array<i32>} : memref<1x8x4xf32, #tpu.memory_space<vmem>>, vector<1x8x4xf32>,
    return
  }
  func.func @transform_0(%arg0: i32, %arg1: i32) -> (i32, i32, i32, i32) {
    %c0_i32 = arith.constant 0 : i32
    %c0_i32_0 = arith.constant 0 : i32
    %c0_i32_1 = arith.constant 0 : i32
    %c0_i32_2 = arith.constant 0 : i32
    return %arg0, %c0_i32, %c0_i32_0, %c0_i32_1 : i32, i32, i32, i32
  }
  func.func @transform_1(%arg0: i32, %arg1: i32) -> (i32, i32, i32) {
    %c0_i32 = arith.constant 0 : i32
    %c0_i32_0 = arith.constant 0 : i32
    return %arg0, %arg1, %c0_i32 : i32, i32, i32
  }
  func.func @transform_2(%arg0: i32, %arg1: i32) -> (i32, i32, i32) {
    %c0_i32 = arith.constant 0 : i32
    %c0_i32_0 = arith.constant 0 : i32
    return %arg0, %arg1, %c0_i32 : i32, i32, i32
  }
}

</mosaic_0001>

<llo_original>
// kernel: tpu_custom_call.1
$region0: #{tpu_custom_call.1}
  #allocation0 [shape = 'u32[]', space=smem, size = 0x4, offset = 0x4, fixed_abs, tag = 'smem constant byte address 0x4 - core index']
  #allocation1 [shape = 'u32[144,128]{1,0:T(1,128)}', space=vmem, size = 0x12000, scoped, tag = 'internal scratch']
  %s0 = inlined_call_operand.vmem [shape: f32[1,3,16,9], index: 0, kind: input, shape index: {}]
  %s1 = inlined_call_operand.vmem [shape: f32[1,8,9], index: 1, kind: input, shape index: {}]
  %s2 = inlined_call_operand.vmem [shape: f32[1,8,4], index: 2, kind: output, shape index: {}]
  %s3 = sld [smem:[#allocation0]]
  $region18: #{tpu_custom_call.1} parent=0
    _
  %s5 = ssub.s32 1, %s3
  %s6 = scalar_select 0, %s5, %s3
  // Predicated region
  $region2: #{tpu_custom_call.1} parent=0 // pred_check
    _
  $region3: #{tpu_custom_call.1} parent=0 // pred_check_branch
    %8 = sbr.rel (0) target = $region5
  $region4: #{tpu_custom_call.1} parent=0 // pred_region
    _
  $region5: #{tpu_custom_call.1} parent=0 // pred_fallthru
    _
  // Predicated region
  $region6: #{tpu_custom_call.1} parent=0 // pred_check
    _
  $region7: #{tpu_custom_call.1} parent=0 // pred_check_branch
    %10 = sbr.rel (0) target = $region9
  $region8: #{tpu_custom_call.1} parent=0 // pred_region
    _
  $region9: #{tpu_custom_call.1} parent=0 // pred_fallthru
    _
  %v11 = vld [vmem:[%s1] sm:$0xff]
  %v12 = vld [vmem:[%s0] sm:$0xff]
  %v13 = vld [vmem:[%s0 + $0x8] sm:$0xff]
  %v14 = vlaneseq
  %v15 = vshrl.u32 %v14, 7
  %v16 = vsub.s32 1, %v15
  %v17 = vrot.slane %v13, %v16
  %vm18 = vcmask 72704
  %v20 = vsel %vm18, %v11, 0
  %vm22 = vcmask 1040384
  %v24 = vsel %vm22, %v13, 0
  %26 = vmatprep.subr.mxu0 0.0
  %27 = vmatpush1.msra.mxu0 %v12
  %28 = vmatprep.subr.mxu0 0.0
  %29 = vmatpush1.msra.mxu0 %v24
  %30 = vmatprep.subr.mxu0 0.0
  %31 = vmatpush1.msra.mxu0 0.0
  %32 = vmatprep.subr.mxu0 0.0
  %33 = vmatpush1.msra.mxu0 0.0
  %34 = vmatprep.subr.mxu0 0.0
  %35 = vmatpush1.msra.mxu0 0.0
  %36 = vmatprep.subr.mxu0 0.0
  %37 = vmatpush1.msra.mxu0 0.0
  %38 = vmatprep.subr.mxu0 0.0
  %39 = vmatpush1.msra.mxu0 0.0
  %40 = vmatprep.subr.mxu0 0.0
  %41 = vmatpush1.msra.mxu0 0.0
  %42 = vmatprep.subr.mxu0 0.0
  %43 = vmatpush1.msra.mxu0 0.0
  %44 = vmatprep.subr.mxu0 0.0
  %45 = vmatpush1.msra.mxu0 0.0
  %46 = vmatprep.subr.mxu0 0.0
  %47 = vmatpush1.msra.mxu0 0.0
  %48 = vmatprep.subr.mxu0 0.0
  %49 = vmatpush1.msra.mxu0 0.0
  %50 = vmatprep.subr.mxu0 0.0
  %51 = vmatpush1.msra.mxu0 0.0
  %52 = vmatprep.subr.mxu0 0.0
  %53 = vmatpush1.msra.mxu0 0.0
  %54 = vmatprep.subr.mxu0 0.0
  %55 = vmatpush1.msra.mxu0 0.0
  %56 = vmatprep.subr.mxu0 0.0
  %57 = vmatpush1.msra.mxu0 0.0
  %58 = vmatprep.subr.mxu0 0.0
  %59 = vmatpush1.msra.mxu0 0.0
  %60 = vmatprep.subr.mxu0 0.0
  %61 = vmatpush1.msra.mxu0 0.0
  %62 = vmatprep.subr.mxu0 0.0
  %63 = vmatpush1.msra.mxu0 0.0
  %64 = vmatprep.subr.mxu0 0.0
  %65 = vmatpush1.msra.mxu0 0.0
  %66 = vmatprep.subr.mxu0 0.0
  %67 = vmatpush1.msra.mxu0 0.0
  %68 = vmatprep.subr.mxu0 0.0
  %69 = vmatpush1.msra.mxu0 0.0
  %70 = vmatprep.subr.mxu0 0.0
  %71 = vmatpush1.msra.mxu0 0.0
  %72 = vmatprep.subr.mxu0 0.0
  %73 = vmatpush1.msra.mxu0 0.0
  %74 = vmatprep.subr.mxu0 0.0
  %75 = vmatpush1.msra.mxu0 0.0
  %76 = vmatprep.subr.mxu0 0.0
  %77 = vmatpush1.msra.mxu0 0.0
  %78 = vmatprep.subr.mxu0 0.0
  %79 = vmatpush1.msra.mxu0 0.0
  %80 = vmatprep.subr.mxu0 0.0
  %81 = vmatpush1.msra.mxu0 0.0
  %82 = vmatprep.subr.mxu0 0.0
  %83 = vmatpush1.msra.mxu0 0.0
  %84 = vmatprep.subr.mxu0 0.0
  %85 = vmatpush1.msra.mxu0 0.0
  %86 = vmatprep.subr.mxu0 0.0
  %87 = vmatpush1.msra.mxu0 0.0
  %88 = vmatprep.subr.mxu0 0.0
  %89 = vmatpush1.msra.mxu0 0.0
  %90 = vmatprep.mubr.f32.mxu0 0.0
  %91 = vmatmul.mubr.f32.gmra.mrb[0].mxu0 %v20
  %v92 = vpop.f32.mrb[0].mxu0
  %v93 = vadd.f32 %v17, %v92
  %v94 = vpop.f32.mrb[0].mxu0
  %95 = vdwg.mxu0
  %v96 = vmax.f32 %v93, 0.0
  %s97 = scalar_lea.vmem %s0, 16
  %v98 = vld [vmem:[%s97] sm:$0xff]
  %v99 = vld [vmem:[%s97 + $0x8] sm:$0xff]
  %v100 = vlaneseq
  %v101 = vshrl.u32 %v100, 7
  %v102 = vsub.s32 1, %v101
  %v103 = vrot.slane %v99, %v102
  %v105 = vsel %vm18, %v96, 0
  %v108 = vsel %vm22, %v99, 0
  %110 = vmatprep.subr.mxu0 0.0
  %111 = vmatpush1.msra.mxu0 %v98
  %112 = vmatprep.subr.mxu0 0.0
  %113 = vmatpush1.msra.mxu0 %v108
  %114 = vmatprep.subr.mxu0 0.0
  %115 = vmatpush1.msra.mxu0 0.0
  %116 = vmatprep.subr.mxu0 0.0
  %117 = vmatpush1.msra.mxu0 0.0
  %118 = vmatprep.subr.mxu0 0.0
  %119 = vmatpush1.msra.mxu0 0.0
  %120 = vmatprep.subr.mxu0 0.0
  %121 = vmatpush1.msra.mxu0 0.0
  %122 = vmatprep.subr.mxu0 0.0
  %123 = vmatpush1.msra.mxu0 0.0
  %124 = vmatprep.subr.mxu0 0.0
  %125 = vmatpush1.msra.mxu0 0.0
  %126 = vmatprep.subr.mxu0 0.0
  %127 = vmatpush1.msra.mxu0 0.0
  %128 = vmatprep.subr.mxu0 0.0
  %129 = vmatpush1.msra.mxu0 0.0
  %130 = vmatprep.subr.mxu0 0.0
  %131 = vmatpush1.msra.mxu0 0.0
  %132 = vmatprep.subr.mxu0 0.0
  %133 = vmatpush1.msra.mxu0 0.0
  %134 = vmatprep.subr.mxu0 0.0
  %135 = vmatpush1.msra.mxu0 0.0
  %136 = vmatprep.subr.mxu0 0.0
  %137 = vmatpush1.msra.mxu0 0.0
  %138 = vmatprep.subr.mxu0 0.0
  %139 = vmatpush1.msra.mxu0 0.0
  %140 = vmatprep.subr.mxu0 0.0
  %141 = vmatpush1.msra.mxu0 0.0
  %142 = vmatprep.subr.mxu0 0.0
  %143 = vmatpush1.msra.mxu0 0.0
  %144 = vmatprep.subr.mxu0 0.0
  %145 = vmatpush1.msra.mxu0 0.0
  %146 = vmatprep.subr.mxu0 0.0
  %147 = vmatpush1.msra.mxu0 0.0
  %148 = vmatprep.subr.mxu0 0.0
  %149 = vmatpush1.msra.mxu0 0.0
  %150 = vmatprep.subr.mxu0 0.0
  %151 = vmatpush1.msra.mxu0 0.0
  %152 = vmatprep.subr.mxu0 0.0
  %153 = vmatpush1.msra.mxu0 0.0
  %154 = vmatprep.subr.mxu0 0.0
  %155 = vmatpush1.msra.mxu0 0.0
  %156 = vmatprep.subr.mxu0 0.0
  %157 = vmatpush1.msra.mxu0 0.0
  %158 = vmatprep.subr.mxu0 0.0
  %159 = vmatpush1.msra.mxu0 0.0
  %160 = vmatprep.subr.mxu0 0.0
  %161 = vmatpush1.msra.mxu0 0.0
  %162 = vmatprep.subr.mxu0 0.0
  %163 = vmatpush1.msra.mxu0 0.0
  %164 = vmatprep.subr.mxu0 0.0
  %165 = vmatpush1.msra.mxu0 0.0
  %166 = vmatprep.subr.mxu0 0.0
  %167 = vmatpush1.msra.mxu0 0.0
  %168 = vmatprep.subr.mxu0 0.0
  %169 = vmatpush1.msra.mxu0 0.0
  %170 = vmatprep.subr.mxu0 0.0
  %171 = vmatpush1.msra.mxu0 0.0
  %172 = vmatprep.subr.mxu0 0.0
  %173 = vmatpush1.msra.mxu0 0.0
  %174 = vmatprep.mubr.f32.mxu0 0.0
  %175 = vmatmul.mubr.f32.gmra.mrb[0].mxu0 %v105
  %v176 = vpop.f32.mrb[0].mxu0
  %v177 = vadd.f32 %v103, %v176
  %v178 = vpop.f32.mrb[0].mxu0
  %179 = vdwg.mxu0
  %v180 = vmax.f32 %v177, 0.0
  %s181 = scalar_lea.vmem %s0, 32
  %v182 = vld [vmem:[%s181] sm:$0xff]
  %v183 = vld [vmem:[%s181 + $0x8] sm:$0xff]
  %v184 = vlaneseq
  %v185 = vshrl.u32 %v184, 7
  %v186 = vsub.s32 1, %v185
  %v187 = vrot.slane %v183, %v186
  %v189 = vsel %vm18, %v180, 0
  %v192 = vsel %vm22, %v183, 0
  %194 = vmatprep.subr.mxu0 0.0
  %195 = vmatpush1.msra.mxu0 %v182
  %196 = vmatprep.subr.mxu0 0.0
  %197 = vmatpush1.msra.mxu0 %v192
  %198 = vmatprep.subr.mxu0 0.0
  %199 = vmatpush1.msra.mxu0 0.0
  %200 = vmatprep.subr.mxu0 0.0
  %201 = vmatpush1.msra.mxu0 0.0
  %202 = vmatprep.subr.mxu0 0.0
  %203 = vmatpush1.msra.mxu0 0.0
  %204 = vmatprep.subr.mxu0 0.0
  %205 = vmatpush1.msra.mxu0 0.0
  %206 = vmatprep.subr.mxu0 0.0
  %207 = vmatpush1.msra.mxu0 0.0
  %208 = vmatprep.subr.mxu0 0.0
  %209 = vmatpush1.msra.mxu0 0.0
  %210 = vmatprep.subr.mxu0 0.0
  %211 = vmatpush1.msra.mxu0 0.0
  %212 = vmatprep.subr.mxu0 0.0
  %213 = vmatpush1.msra.mxu0 0.0
  %214 = vmatprep.subr.mxu0 0.0
  %215 = vmatpush1.msra.mxu0 0.0
  %216 = vmatprep.subr.mxu0 0.0
  %217 = vmatpush1.msra.mxu0 0.0
  %218 = vmatprep.subr.mxu0 0.0
  %219 = vmatpush1.msra.mxu0 0.0
  %220 = vmatprep.subr.mxu0 0.0
  %221 = vmatpush1.msra.mxu0 0.0
  %222 = vmatprep.subr.mxu0 0.0
  %223 = vmatpush1.msra.mxu0 0.0
  %224 = vmatprep.subr.mxu0 0.0
  %225 = vmatpush1.msra.mxu0 0.0
  %226 = vmatprep.subr.mxu0 0.0
  %227 = vmatpush1.msra.mxu0 0.0
  %228 = vmatprep.subr.mxu0 0.0
  %229 = vmatpush1.msra.mxu0 0.0
  %230 = vmatprep.subr.mxu0 0.0
  %231 = vmatpush1.msra.mxu0 0.0
  %232 = vmatprep.subr.mxu0 0.0
  %233 = vmatpush1.msra.mxu0 0.0
  %234 = vmatprep.subr.mxu0 0.0
  %235 = vmatpush1.msra.mxu0 0.0
  %236 = vmatprep.subr.mxu0 0.0
  %237 = vmatpush1.msra.mxu0 0.0
  %238 = vmatprep.subr.mxu0 0.0
  %239 = vmatpush1.msra.mxu0 0.0
  %240 = vmatprep.subr.mxu0 0.0
  %241 = vmatpush1.msra.mxu0 0.0
  %242 = vmatprep.subr.mxu0 0.0
  %243 = vmatpush1.msra.mxu0 0.0
  %244 = vmatprep.subr.mxu0 0.0
  %245 = vmatpush1.msra.mxu0 0.0
  %246 = vmatprep.subr.mxu0 0.0
  %247 = vmatpush1.msra.mxu0 0.0
  %248 = vmatprep.subr.mxu0 0.0
  %249 = vmatpush1.msra.mxu0 0.0
  %250 = vmatprep.subr.mxu0 0.0
  %251 = vmatpush1.msra.mxu0 0.0
  %252 = vmatprep.subr.mxu0 0.0
  %253 = vmatpush1.msra.mxu0 0.0
  %254 = vmatprep.subr.mxu0 0.0
  %255 = vmatpush1.msra.mxu0 0.0
  %256 = vmatprep.subr.mxu0 0.0
  %257 = vmatpush1.msra.mxu0 0.0
  %258 = vmatprep.mubr.f32.mxu0 0.0
  %259 = vmatmul.mubr.f32.gmra.mrb[0].mxu0 %v189
  %v260 = vpop.f32.mrb[0].mxu0
  %v261 = vadd.f32 %v187, %v260
  %v262 = vpop.f32.mrb[0].mxu0
  %263 = vdwg.mxu0
  %vm264 = vcmask 31744
  %265 = vst.msk [vmem:[%s2] sm:$0xff] %vm264, %v261
  // Predicated region
  $region10: #{tpu_custom_call.1} parent=0 // pred_check
    _
  $region11: #{tpu_custom_call.1} parent=0 // pred_check_branch
    %267 = sbr.rel (0) target = $region13
  $region12: #{tpu_custom_call.1} parent=0 // pred_region
    _
  $region13: #{tpu_custom_call.1} parent=0 // pred_fallthru
    _
  // Predicated region
  $region14: #{tpu_custom_call.1} parent=0 // pred_check
    _
  $region15: #{tpu_custom_call.1} parent=0 // pred_check_branch
    %269 = sbr.rel (0) target = $region17
  $region16: #{tpu_custom_call.1} parent=0 // pred_region
    _
  $region17: #{tpu_custom_call.1} parent=0 // pred_fallthru
    _

</llo_original>
